<compile_context>
chip_gen: v7x
topology: tpu7x:2x2x1
jax: 0.10.0
libtpu: 0.0.40
codegen_flags: <defaults>
</compile_context>

<pallas_src>
import functools

import jax
import jax.numpy as jnp
from jax.experimental import pallas as pl
from jax.experimental.pallas import tpu as pltpu


def _temporal_relation_kernel(x_ref, prevb_ref, nextb_ref, *rest, tt, n, time_window):
    """One block of TT timesteps, flattened to (TT*N, D) rows.

    x_ref     : (TT*N, D) feats rows of this block
    prevb_ref : (N, D)    feats[max(b*TT - 1, 0)]        (left halo timestep)
    nextb_ref : (N, D)    feats[min((b+1)*TT, Tpad-1)]   (right halo timestep)
    first_ref : (N, D)    feats[0]  (only passed when time_window > 1)
    wt_ref    : (D, D)    0.5 * W.T (pre-scaled, resident)
    out_ref   : (TT*N, D)
    """
    if time_window > 1:
        first_ref, wt_ref, out_ref = rest
    else:
        wt_ref, out_ref = rest

    x = x_ref[...]
    # number of leading timesteps that the time_window fixup could ever touch
    k = min(time_window, tt) if time_window > 1 else 1

    # ---- head: local timesteps [0, k) ------------------------------------
    if k == 1:
        prev_head = prevb_ref[...]
    else:
        prev_head = jnp.concatenate([prevb_ref[...], x[: (k - 1) * n, :]], axis=0)
    if time_window > 1:
        # only rows with global timestep < time_window take feats[0] as "prev";
        # the mask region is k*n rows (a handful), not the full block.
        b = pl.program_id(0)
        row = jax.lax.broadcasted_iota(jnp.int32, (k * n, 1), 0)
        t_glob = b * tt + row // n
        first = first_ref[...] if k == 1 else jnp.tile(first_ref[...], (k, 1))
        prev_head = jnp.where(t_glob < time_window, first, prev_head)
    if k < tt:
        nxt_head = x[n : (k + 1) * n, :]
    elif tt == 1:
        nxt_head = nextb_ref[...]
    else:
        nxt_head = jnp.concatenate([x[n:, :], nextb_ref[...]], axis=0)
    pieces = [prev_head + nxt_head]

    # ---- middle: local timesteps [k, tt-1) --------------------------------
    if k <= tt - 2:
        pieces.append(x[(k - 1) * n : (tt - 2) * n, :] + x[(k + 1) * n :, :])

    # ---- last: local timestep tt-1 (if not already covered by the head) ---
    if k < tt:
        pieces.append(x[(tt - 2) * n : (tt - 1) * n, :] + nextb_ref[...])

    s = pieces[0] if len(pieces) == 1 else jnp.concatenate(pieces, axis=0)

    att = jnp.dot(s, wt_ref[...], preferred_element_type=jnp.float32)
    out_ref[...] = (att + x.astype(jnp.float32)).astype(out_ref.dtype)


def _vmem_caps():
    """Generation-aware VMEM block budget and scoped-VMEM limit."""
    cap = 64 << 20  # conservative default = v7x per-TensorCore VMEM
    try:
        cap = int(pltpu.get_tpu_info().vmem_capacity_bytes)
    except Exception:
        pass
    block_budget = (cap * 3) // 8   # ~48 MiB on v5e/v6e (128 MiB), ~24 MiB on v7x (64 MiB)
    vmem_limit = (cap * 3) // 4     # ~96 MiB on v5e/v6e, ~48 MiB on v7x
    return block_budget, vmem_limit


def _pick_tt(T, N, D, itemsize, time_window, block_budget):
    """Pick the number of timesteps per block."""
    # resident / halo blocks (double-buffered by the default pipeline)
    fixed = 2 * D * D * itemsize + (6 if time_window > 1 else 4) * N * D * itemsize
    # in + out blocks (2x buffered) + shifted-sum & f32-att temporaries
    per_row = D * (6 * itemsize + 8)
    avail = max(block_budget - fixed, N * per_row)
    rows_cap = min(avail // per_row, 2048)   # >~2048 rows: diminishing returns
    tt_max = max(1, min(T, int(rows_cap) // N))
    # keep >= 4 grid steps when T allows: shards across v7x's two TensorCores
    # ("parallel" axis) and gives the pipeline real steps to overlap DMA.
    if T >= 4:
        tt_max = min(tt_max, max(1, T // 4))
    elif T > 1:
        tt_max = 1
    # prefer a divisor of T (avoids the padding copy) unless it costs >2x block size
    best_div = 1
    for cand in range(tt_max, 0, -1):
        if T % cand == 0:
            best_div = cand
            break
    return best_div if 2 * best_div >= tt_max else tt_max


def temporal_relation(feats, weight, time_window=1, tt=None):
    """feats: (T, N, D); weight: (D, D) = (out_features, in_features) as in torch.

    Returns (T, N, D) = relation/2 + feats, matching TemporalRelation.forward.
    Tiling constraints: N must be a multiple of 8 (16 for bf16), D a multiple of 128.
    """
    T, N, D = feats.shape
    if time_window < 1:
        # TODO(synk): time_window=0 makes PyTorch read att[-1] (wraps to att[T-1]);
        # that negative-index wrap is not reproduced here.
        raise ValueError("time_window must be >= 1")
    assert weight.shape == (D, D)

    itemsize = jnp.dtype(feats.dtype).itemsize
    sub = 16 if itemsize < 4 else 8
    assert N % sub == 0 and D % 128 == 0, (
        "batch dim must be a multiple of the sublane tile and feat_dim a "
        "multiple of 128 for this kernel")

    block_budget, vmem_cap = _vmem_caps()
    if tt is None:
        tt = _pick_tt(T, N, D, itemsize, time_window, block_budget)
    tt = max(1, min(int(tt), T))
    nblk = (T + tt - 1) // tt
    Tpad = nblk * tt
    rows = tt * N

    if Tpad != T:
        # Edge-replicate the last timestep so that "next" of the real last
        # timestep still resolves to feats[T-1] inside the padded array.
        pad = jnp.broadcast_to(feats[T - 1 : T], (Tpad - T, N, D))
        feats_p = jnp.concatenate([feats, pad], axis=0)
    else:
        feats_p = feats

    feats2 = feats_p.reshape(Tpad * N, D)   # time-major 2-D view
    # hoist the transpose AND the /2 out of the kernel (0.5 scale is exact)
    wt = (weight.T * 0.5).astype(weight.dtype)

    kernel = functools.partial(_temporal_relation_kernel,
                               tt=tt, n=N, time_window=time_window)

    in_specs = [
        # main stream: each block of TT timesteps read from HBM once
        pl.BlockSpec((rows, D), lambda b: (b, 0)),
        # left halo: feats[max(b*tt - 1, 0)]   (block units of N rows = 1 timestep)
        pl.BlockSpec((N, D), lambda b: (jnp.maximum(b * tt - 1, 0), 0)),
        # right halo: feats[min((b+1)*tt, Tpad-1)]
        pl.BlockSpec((N, D), lambda b: (jnp.minimum((b + 1) * tt, Tpad - 1), 0)),
    ]
    args = [feats2, feats2, feats2]
    if time_window > 1:
        # feats[0]; only needed (and only DMA'd) when time_window > 1
        in_specs.append(pl.BlockSpec((N, D), lambda b: (0, 0)))
        args.append(feats2)
    # 0.5 * W.T, resident across the whole grid
    in_specs.append(pl.BlockSpec((D, D), lambda b: (0, 0)))
    args.append(wt)

    # Conservative per-step VMEM estimate -> explicit, generation-aware limit.
    est = (4 * rows * D * itemsize + rows * D * (2 * itemsize + 8)
           + 2 * D * D * itemsize + 6 * N * D * itemsize)
    vmem_limit = int(min(vmem_cap, max(2 * est, 16 << 20)))

    cost = pl.CostEstimate(
        flops=2 * Tpad * N * D * D,
        transcendentals=0,
        bytes_accessed=(2 * Tpad * N * D + D * D + 3 * nblk * N * D) * itemsize)

    out2 = pl.pallas_call(
        kernel,
        out_shape=jax.ShapeDtypeStruct((Tpad * N, D), feats.dtype),
        grid_spec=pltpu.PrefetchScalarGridSpec(
            num_scalar_prefetch=0,
            grid=(nblk,),
            in_specs=in_specs,
            out_specs=pl.BlockSpec((rows, D), lambda b: (b, 0)),
        ),
        compiler_params=pltpu.CompilerParams(
            dimension_semantics=("parallel",),   # stateless -> shard across TCs (v7x)
            vmem_limit_bytes=vmem_limit),
        cost_estimate=cost,
    )(*args)

    out = out2.reshape(Tpad, N, D)
    return out[:T] if Tpad != T else out


def temporal_relation_ref(feats, weight, time_window=1):
    """Pure-JAX reference, mirrors the PyTorch forward literally."""
    T = feats.shape[0]
    att = jnp.einsum('tnd,od->tno', feats, weight)
    outs = []
    for t in range(T):
        prev = att[0] if t < time_window else att[t - 1]
        nxt = att[t] if t == T - 1 else att[t + 1]
        outs.append(prev + nxt)
    rel = jnp.stack(outs, axis=0)
    return rel / 2 + feats


if __name__ == "__main__":
    T, N, D = 32, 16, 128          # (seq, batch, feat_dim): small but TPU-tile aligned

    key = jax.random.PRNGKey(0)
    k_feats, k_w = jax.random.split(key)
    feats = jax.random.normal(k_feats, (T, N, D), dtype=jnp.float32)
    bound = 1.0 / (D ** 0.5)       # nn.Linear(bias=False) default init range
    weight = jax.random.uniform(k_w, (D, D), dtype=jnp.float32,
                                minval=-bound, maxval=bound)

    # --- time_window = 1, multi-block ---
    ref = temporal_relation_ref(feats, weight, time_window=1)
    out = jax.block_until_ready(temporal_relation(feats, weight, time_window=1, tt=8))
    assert out.shape == (T, N, D)
    assert jnp.allclose(out, ref, atol=1e-5, rtol=1e-5), "f32 multi-block mismatch"

    # --- auto tile size (generation-aware pick; nblk >= 4 here) ---
    out_auto = jax.block_until_ready(temporal_relation(feats, weight, time_window=1))
    assert jnp.allclose(out_auto, ref, atol=1e-5, rtol=1e-5), "f32 auto-tile mismatch"

    # --- T not divisible by tt (exercises the edge-replication padding path) ---
    feats30 = feats[:30]
    ref30 = temporal_relation_ref(feats30, weight, time_window=1)
    out30 = jax.block_until_ready(temporal_relation(feats30, weight, time_window=1, tt=8))
    assert out30.shape == (30, N, D)
    assert jnp.allclose(out30, ref30, atol=1e-5, rtol=1e-5), "f32 padded-T mismatch"

    # --- time_window > 1 (head-region masking), tw <= tt and tw > tt ---
    ref_tw = temporal_relation_ref(feats, weight, time_window=3)
    out_tw = jax.block_until_ready(temporal_relation(feats, weight, time_window=3, tt=8))
    assert jnp.allclose(out_tw, ref_tw, atol=1e-5, rtol=1e-5), "time_window=3 tt=8 mismatch"
    out_tw2 = jax.block_until_ready(temporal_relation(feats, weight, time_window=3, tt=2))
    assert jnp.allclose(out_tw2, ref_tw, atol=1e-5, rtol=1e-5), "time_window=3 tt=2 mismatch"

    # --- bf16 inputs: MXU-native, f32 accumulation inside the kernel ---
    feats_bf = feats.astype(jnp.bfloat16)
    weight_bf = weight.astype(jnp.bfloat16)
    out_bf = jax.block_until_ready(
        temporal_relation(feats_bf, weight_bf, time_window=1, tt=8))
    ref_bf = temporal_relation_ref(feats_bf.astype(jnp.float32),
                                   weight_bf.astype(jnp.float32),
                                   time_window=1)
    assert jnp.allclose(out_bf.astype(jnp.float32), ref_bf,
                        atol=1e-1, rtol=5e-2), "bf16 mismatch"

    print("KERNEL_OK")
</pallas_src>

<mosaic_0001>
module attributes {stable_mosaic.version = 11 : i64} {
  func.func @_temporal_relation_kernel(%arg0: i32, %arg1: memref<128x128xf32, #tpu.memory_space<vmem>>, %arg2: memref<16x128xf32, #tpu.memory_space<vmem>>, %arg3: memref<16x128xf32, #tpu.memory_space<vmem>>, %arg4: memref<128x128xf32, #tpu.memory_space<vmem>>, %arg5: memref<128x128xf32, #tpu.memory_space<vmem>>) attributes {dimension_semantics = [#tpu.dimension_semantics<parallel>], iteration_bounds = array<i64: 4>, scalar_prefetch = 0 : i64, scratch_operands = 0 : i64, tpu.core_type = #tpu.core_type<tc>, window_params = [{transform_indices = @transform_0, window_bounds = array<i64: 128, 128>}, {transform_indices = @transform_1, window_bounds = array<i64: 16, 128>}, {transform_indices = @transform_2, window_bounds = array<i64: 16, 128>}, {pipeline_mode = #tpu.pipeline_mode<synchronous>, transform_indices = @transform_3, window_bounds = array<i64: 128, 128>}, {transform_indices = @transform_4, window_bounds = array<i64: 128, 128>}]} {
    %c0 = arith.constant 0 : index
    %c0_0 = arith.constant 0 : index
    %0 = vector.load %arg1[%c0, %c0_0] : memref<128x128xf32, #tpu.memory_space<vmem>>, vector<128x128xf32>
    %c0_1 = arith.constant 0 : index
    %c0_2 = arith.constant 0 : index
    %1 = vector.load %arg2[%c0_1, %c0_2] : memref<16x128xf32, #tpu.memory_space<vmem>>, vector<16x128xf32>
    %2 = vector.extract_strided_slice %0 {offsets = [16, 0], sizes = [16, 128], strides = [1, 1]} : vector<128x128xf32> to vector<16x128xf32>
    %3 = arith.addf %1, %2 : vector<16x128xf32>
    %4 = vector.extract_strided_slice %0 {offsets = [0, 0], sizes = [96, 128], strides = [1, 1]} : vector<128x128xf32> to vector<96x128xf32>
    %5 = vector.extract_strided_slice %0 {offsets = [32, 0], sizes = [96, 128], strides = [1, 1]} : vector<128x128xf32> to vector<96x128xf32>
    %6 = arith.addf %4, %5 : vector<96x128xf32>
    %7 = vector.extract_strided_slice %0 {offsets = [96, 0], sizes = [16, 128], strides = [1, 1]} : vector<128x128xf32> to vector<16x128xf32>
    %c0_3 = arith.constant 0 : index
    %c0_4 = arith.constant 0 : index
    %8 = vector.load %arg3[%c0_3, %c0_4] : memref<16x128xf32, #tpu.memory_space<vmem>>, vector<16x128xf32>
    %9 = arith.addf %7, %8 : vector<16x128xf32>
    %10 = tpu.concatenate %3, %6, %9 in 0 : vector<16x128xf32>, vector<96x128xf32>, vector<16x128xf32> -> vector<128x128xf32>
    %c0_5 = arith.constant 0 : index
    %c0_6 = arith.constant 0 : index
    %11 = vector.load %arg4[%c0_5, %c0_6] : memref<128x128xf32, #tpu.memory_space<vmem>>, vector<128x128xf32>
    %cst = arith.constant dense<0.000000e+00> : vector<128x128xf32>
    %12 = tpu.matmul %10, %11, %cst {dimension_numbers = #tpu.dot_dimension_numbers<[1], [0], [0], [1], [0, 0, 1, 1], [], []>} : vector<128x128xf32>, vector<128x128xf32>, vector<128x128xf32> -> vector<128x128xf32>
    %13 = arith.addf %12, %0 : vector<128x128xf32>
    %c0_7 = arith.constant 0 : index
    %c0_8 = arith.constant 0 : index
    %14 = vector.load %arg5[%c0_7, %c0_8] : memref<128x128xf32, #tpu.memory_space<vmem>>, vector<128x128xf32>
    tpu.vector_store %arg5[%c0_7, %c0_8], %13 {strides = array<i32>} : memref<128x128xf32, #tpu.memory_space<vmem>>, vector<128x128xf32>,
    return
  }
  func.func @transform_0(%arg0: i32) -> (i32, i32) {
    %c0_i32 = arith.constant 0 : i32
    %c0_i32_0 = arith.constant 0 : i32
    return %arg0, %c0_i32 : i32, i32
  }
  func.func @transform_1(%arg0: i32) -> (i32, i32) {
    %c8_i32 = arith.constant 8 : i32
    %0 = arith.muli %arg0, %c8_i32 : i32
    %c1_i32 = arith.constant 1 : i32
    %1 = arith.subi %0, %c1_i32 : i32
    %c0_i32 = arith.constant 0 : i32
    %2 = arith.maxsi %1, %c0_i32 : i32
    %c0_i32_0 = arith.constant 0 : i32
    %c0_i32_1 = arith.constant 0 : i32
    return %2, %c0_i32_0 : i32, i32
  }
  func.func @transform_2(%arg0: i32) -> (i32, i32) {
    %c1_i32 = arith.constant 1 : i32
    %0 = arith.addi %arg0, %c1_i32 : i32
    %c8_i32 = arith.constant 8 : i32
    %1 = arith.muli %0, %c8_i32 : i32
    %c31_i32 = arith.constant 31 : i32
    %2 = arith.minsi %1, %c31_i32 : i32
    %c0_i32 = arith.constant 0 : i32
    %c0_i32_0 = arith.constant 0 : i32
    return %2, %c0_i32 : i32, i32
  }
  func.func @transform_3(%arg0: i32) -> (i32, i32) {
    %c0_i32 = arith.constant 0 : i32
    %c0_i32_0 = arith.constant 0 : i32
    %c0_i32_1 = arith.constant 0 : i32
    return %c0_i32, %c0_i32_0 : i32, i32
  }
  func.func @transform_4(%arg0: i32) -> (i32, i32) {
    %c0_i32 = arith.constant 0 : i32
    %c0_i32_0 = arith.constant 0 : i32
    return %arg0, %c0_i32 : i32, i32
  }
}

</mosaic_0001>

<llo_original>
// kernel: tpu_custom_call.1
$region0: #{tpu_custom_call.1}
  #allocation0 [shape = 'u32[]', space=smem, size = 0x4, offset = 0x4, fixed_abs, tag = 'smem constant byte address 0x4 - core index']
  #allocation1 [shape = 'u32[144,128]{1,0:T(1,128)}', space=vmem, size = 0x12000, scoped, tag = 'internal scratch']
  %s0 = inlined_call_operand.hbm [shape: f32[512,128], index: 0, kind: input, shape index: {}]
  %s1 = inlined_call_operand.hbm [shape: f32[512,128], index: 1, kind: input, shape index: {}]
  %s2 = inlined_call_operand.hbm [shape: f32[512,128], index: 2, kind: input, shape index: {}]
  %s3 = inlined_call_operand.hbm [shape: f32[128,128], index: 3, kind: input, shape index: {}]
  %s4 = inlined_call_operand.hbm [shape: f32[512,128], index: 4, kind: output, shape index: {}]
  %s5 = sld [smem:[#allocation0]]
  $region65: #{tpu_custom_call.1} parent=0
    _
  %s7 = ssub.s32 1, %s5
  %s8 = scalar_select 0, %s7, %s5
  $region1: #{tpu_custom_call.1} parent=0
    #allocation2 [shape = 'u8[131072]{0}', space=vmem, size = 0x20000, scoped, tag = 'input window, operand 0']
    #allocation3 [shape = 's32[2]{0}', space=sflag, size = 0x8, scoped, tag = 'scoped memory for tpu_custom_call.1']
    #allocation4 [shape = 's32[2]{0}', space=sflag, size = 0x8, scoped, tag = 'scoped memory for tpu_custom_call.1']
    #allocation5 [shape = 'u8[16384]{0}', space=vmem, size = 0x4000, scoped, tag = 'input window, operand 1']
    #allocation6 [shape = 's32[2]{0}', space=sflag, size = 0x8, scoped, tag = 'scoped memory for tpu_custom_call.1']
    #allocation7 [shape = 'u8[16384]{0}', space=vmem, size = 0x4000, scoped, tag = 'input window, operand 2']
    #allocation8 [shape = 'u8[65536]{0}', space=vmem, size = 0x10000, scoped, tag = 'input window, operand 3, single buffered']
    #allocation9 [shape = 's32[1]{0}', space=sflag, size = 0x4, scoped, tag = 'scoped memory for tpu_custom_call.1']
    #allocation10 [shape = 'u8[131072]{0}', space=vmem, size = 0x20000, scoped, tag = 'output window, operand 0']
    %9 = vsyncpa [#allocation3], 0
    %s10 = scalar_lea.sflag [#allocation3], 1
    %11 = vsyncpa %s10, 0
    %12 = vsyncpa [#allocation6], 0
    %s13 = scalar_lea.sflag [#allocation6], 1
    %14 = vsyncpa %s13, 0
    %15 = vsyncpa [#allocation9], 0
    %16 = vsyncpa [#allocation4], 0
    %s17 = scalar_lea.sflag [#allocation4], 1
    %18 = vsyncpa %s17, 0
    loop: start=0, step=1, limit=6
    $region2: #{tpu_custom_call.1} parent=1 // loop_pre_header
      _
    $region3: #{tpu_custom_call.1} parent=1 // loop_header
      %s20 = sphi 0, %s24
      %p21 = scmp.ge.s32.totalorder %s20, 6
      %s30 = sphi 0, %s32
      %s33 = sphi 0, %s30
      %s34 = sphi 0, %s33
      %s50 = sphi 0, %s34
      %s64 = sphi 0, %s66
      %s67 = sphi 0, %s64
      %s68 = sphi 0, %s67
      %s84 = sphi 0, %s68
      %s98 = sphi 0, %s100
      %s101 = sphi 0, %s98
      %s102 = sphi 0, %s101
      %s118 = sphi 0, %s102
      %s122 = sphi 0, %s122
      %s124 = sphi 0, %s122
      %s125 = sphi 0, %s124
      %s139 = sphi 0, %s125
      %s145 = sphi 0, %s147
      %s148 = sphi 0, %s145
      %s149 = sphi 0, %s148
      %s165 = sphi 0, %s149
    $region4: #{tpu_custom_call.1} parent=1 // loop_header_branch
      %23 = sbr.rel (%p21) target = $region8
    $region5: #{tpu_custom_call.1} parent=1 // loop_body
      %s25 = ssub.s32 %s20, 1
      %s26 = ssub.s32 %s20, 2
      %s27 = sadd.s32 %s20, 1
      %s28 = ssub.s32 %s20, %s27
      %p29 = scmp.eq.s32.totalorder %s28, 0
      %s31 = sadd.s32 %s30, 1
      %s32 = scalar_select %p29, %s30, %s31
      %p35 = pneg %p29
      %p36 = scmp.eq.s32.totalorder %s20, 3
      %p37 = por %p35, %p36
      %p38 = scmp.ne.s32.totalorder %s30, %s33
      %p39 = scmp.eq.s32.totalorder %s20, 0
      %p40 = por %p38, %p39
      %p41 = scmp.ne.s32.totalorder %s30, %s33
      %p42 = scmp.eq.s32.totalorder %s25, 3
      %p43 = por %p41, %p42
      %p44 = scmp.ne.s32.totalorder %s33, %s34
      %p45 = scmp.eq.s32.totalorder %s25, 0
      %p46 = por %p44, %p45
      %p47 = scmp.ne.s32.totalorder %s33, %s34
      %p48 = scmp.eq.s32.totalorder %s26, 3
      %p49 = por %p47, %p48
      %p51 = scmp.ne.s32.totalorder %s34, %s50
      %p52 = scmp.eq.s32.totalorder %s26, 0
      %p53 = por %p51, %p52
      %s54 = smul.u32 %s20, 8
      %s55 = ssub.s32 %s54, 1
      %p56 = scmp.gt.s32.totalorder %s55, 0
      %s57 = scalar_select %p56, %s55, 0
      %s58 = smul.u32 %s27, 8
      %s59 = ssub.s32 %s58, 1
      %p60 = scmp.gt.s32.totalorder %s59, 0
      %s61 = scalar_select %p60, %s59, 0
      %s62 = ssub.s32 %s57, %s61
      %p63 = scmp.eq.s32.totalorder %s62, 0
      %s65 = sadd.s32 %s64, 1
      %s66 = scalar_select %p63, %s64, %s65
      %p69 = pneg %p63
      %p70 = scmp.eq.s32.totalorder %s20, 3
      %p71 = por %p69, %p70
      %p72 = scmp.ne.s32.totalorder %s64, %s67
      %p73 = scmp.eq.s32.totalorder %s20, 0
      %p74 = por %p72, %p73
      %p75 = scmp.ne.s32.totalorder %s64, %s67
      %p76 = scmp.eq.s32.totalorder %s25, 3
      %p77 = por %p75, %p76
      %p78 = scmp.ne.s32.totalorder %s67, %s68
      %p79 = scmp.eq.s32.totalorder %s25, 0
      %p80 = por %p78, %p79
      %p81 = scmp.ne.s32.totalorder %s67, %s68
      %p82 = scmp.eq.s32.totalorder %s26, 3
      %p83 = por %p81, %p82
      %p85 = scmp.ne.s32.totalorder %s68, %s84
      %p86 = scmp.eq.s32.totalorder %s26, 0
      %p87 = por %p85, %p86
      %s88 = sadd.s32 %s20, 1
      %s89 = smul.u32 %s88, 8
      %p90 = scmp.lt.s32.totalorder %s89, 31
      %s91 = scalar_select %p90, %s89, 31
      %s92 = sadd.s32 %s27, 1
      %s93 = smul.u32 %s92, 8
      %p94 = scmp.lt.s32.totalorder %s93, 31
      %s95 = scalar_select %p94, %s93, 31
      %s96 = ssub.s32 %s91, %s95
      %p97 = scmp.eq.s32.totalorder %s96, 0
      %s99 = sadd.s32 %s98, 1
      %s100 = scalar_select %p97, %s98, %s99
      %p103 = pneg %p97
      %p104 = scmp.eq.s32.totalorder %s20, 3
      %p105 = por %p103, %p104
      %p106 = scmp.ne.s32.totalorder %s98, %s101
      %p107 = scmp.eq.s32.totalorder %s20, 0
      %p108 = por %p106, %p107
      %p109 = scmp.ne.s32.totalorder %s98, %s101
      %p110 = scmp.eq.s32.totalorder %s25, 3
      %p111 = por %p109, %p110
      %p112 = scmp.ne.s32.totalorder %s101, %s102
      %p113 = scmp.eq.s32.totalorder %s25, 0
      %p114 = por %p112, %p113
      %p115 = scmp.ne.s32.totalorder %s101, %s102
      %p116 = scmp.eq.s32.totalorder %s26, 3
      %p117 = por %p115, %p116
      %p119 = scmp.ne.s32.totalorder %s102, %s118
      %p120 = scmp.eq.s32.totalorder %s26, 0
      %p121 = por %p119, %p120
      %s123 = sadd.s32 %s122, 1
      %p126 = scmp.eq.s32.totalorder %s20, 3
      %p127 = scmp.ne.s32.totalorder %s122, %s124
      %p128 = scmp.eq.s32.totalorder %s20, 0
      %p129 = por %p127, %p128
      %p130 = scmp.ne.s32.totalorder %s122, %s124
      %p131 = scmp.eq.s32.totalorder %s25, 3
      %p132 = por %p130, %p131
      %p133 = scmp.ne.s32.totalorder %s124, %s125
      %p134 = scmp.eq.s32.totalorder %s25, 0
      %p135 = por %p133, %p134
      %p136 = scmp.ne.s32.totalorder %s124, %s125
      %p137 = scmp.eq.s32.totalorder %s26, 3
      %p138 = por %p136, %p137
      %p140 = scmp.ne.s32.totalorder %s125, %s139
      %p141 = scmp.eq.s32.totalorder %s26, 0
      %p142 = por %p140, %p141
      %s143 = ssub.s32 %s20, %s27
      %p144 = scmp.eq.s32.totalorder %s143, 0
      %s146 = sadd.s32 %s145, 1
      %s147 = scalar_select %p144, %s145, %s146
      %p150 = pneg %p144
      %p151 = scmp.eq.s32.totalorder %s20, 3
      %p152 = por %p150, %p151
      %p153 = scmp.ne.s32.totalorder %s145, %s148
      %p154 = scmp.eq.s32.totalorder %s20, 0
      %p155 = por %p153, %p154
      %p156 = scmp.ne.s32.totalorder %s145, %s148
      %p157 = scmp.eq.s32.totalorder %s25, 3
      %p158 = por %p156, %p157
      %p159 = scmp.ne.s32.totalorder %s148, %s149
      %p160 = scmp.eq.s32.totalorder %s25, 0
      %p161 = por %p159, %p160
      %p162 = scmp.ne.s32.totalorder %s148, %s149
      %p163 = scmp.eq.s32.totalorder %s26, 3
      %p164 = por %p162, %p163
      %p166 = scmp.ne.s32.totalorder %s149, %s165
      %p167 = scmp.eq.s32.totalorder %s26, 0
      %p168 = por %p166, %p167
      %p169 = scmp.le.s32.totalorder 1, %s20
      %p170 = scmp.lt.s32.totalorder %s20, 5
      %p171 = pnand %p169, %p170
      %p172 = pneg %p171
      // Predicated region
      $region9: #{tpu_custom_call.1} parent=5 // pred_check
        _
      $region10: #{tpu_custom_call.1} parent=5 // pred_check_branch
        %174 = sbr.rel (%p171) target = $region12
      $region11: #{tpu_custom_call.1} parent=5 // pred_region
        %s175 = ssub.s32 %s20, 1
        // Predicated region
        $region13: #{tpu_custom_call.1} parent=11 // pred_check
          %p176 = pneg %p135
        $region14: #{tpu_custom_call.1} parent=11 // pred_check_branch
          %178 = sbr.rel (%p176) target = $region16
        $region15: #{tpu_custom_call.1} parent=11 // pred_region
          %s180 = ssub.s32 2048, 2048
          %181 = vsyncadd [#allocation9], %s180
          %s182 = sshll.u32 [#allocation8], 4
          %s183 = int_to_ptr.vmem [resolvable:$true] %s182
          %188 = dma.hbm_to_vmem [thread:$0]  %s3, 2048, %s183, [#allocation9], 128, 128, 8
        $region16: #{tpu_custom_call.1} parent=11 // pred_fallthru
          _
      $region12: #{tpu_custom_call.1} parent=5 // pred_fallthru
        _
      %p189 = scmp.lt.s32.totalorder %s20, 4
      // Predicated region
      $region17: #{tpu_custom_call.1} parent=5 // pred_check
        %p190 = pneg %p189
      $region18: #{tpu_custom_call.1} parent=5 // pred_check_branch
        %192 = sbr.rel (%p190) target = $region20
      $region19: #{tpu_custom_call.1} parent=5 // pred_region
        // Predicated region
        $region21: #{tpu_custom_call.1} parent=19 // pred_check
          %p193 = pneg %p40
        $region22: #{tpu_custom_call.1} parent=19 // pred_check_branch
          %195 = sbr.rel (%p193) target = $region24
        $region23: #{tpu_custom_call.1} parent=19 // pred_region
          %s196 = sand.u32 %s30, 1
          %s197 = scalar_lea.sflag [#allocation3], %s196
          %s198 = sand.u32 %s30, 1
          %s199 = smul.addr %s198, 128
          %s200 = scalar_lea.vmem [#allocation2], %s199
          %s201 = smul.u32 16, %s20
          %s203 = ssub.s32 2048, 2048
          %204 = vsyncadd %s197, %s203
          %s205 = smul.addr %s201, 128
          %s206 = scalar_lea.hbm %s0, %s205
          %s207 = sshll.u32 %s200, 4
          %s208 = int_to_ptr.vmem [resolvable:$true] %s207
          %213 = dma.hbm_to_vmem [thread:$0]  %s206, 2048, %s208, %s197, 128, 128, 8
        $region24: #{tpu_custom_call.1} parent=19 // pred_fallthru
          _
        // Predicated region
        $region25: #{tpu_custom_call.1} parent=19 // pred_check
          %p214 = pneg %p74
        $region26: #{tpu_custom_call.1} parent=19 // pred_check_branch
          %216 = sbr.rel (%p214) target = $region28
        $region27: #{tpu_custom_call.1} parent=19 // pred_region
          %s217 = sand.u32 %s20, 1
          %s218 = scalar_lea.sflag [#allocation6], %s217
          %s219 = sand.u32 %s64, 1
          %s220 = smul.addr %s219, 16
          %s221 = scalar_lea.vmem [#allocation5], %s220
          %s222 = smul.u32 %s20, 8
          %s223 = ssub.s32 %s222, 1
          %p224 = scmp.gt.s32.totalorder %s223, 0
          %s225 = scalar_select %p224, %s223, 0
          %s226 = smul.u32 2, %s225
          %s228 = ssub.s32 256, 256
          %229 = vsyncadd %s218, %s228
          %s230 = smul.addr %s226, 128
          %s231 = scalar_lea.hbm %s1, %s230
          %s232 = sshll.u32 %s221, 4
          %s233 = int_to_ptr.vmem [resolvable:$true] %s232
          %238 = dma.hbm_to_vmem [thread:$0]  %s231, 256, %s233, %s218, 128, 128, 8
        $region28: #{tpu_custom_call.1} parent=19 // pred_fallthru
          _
        // Predicated region
        $region29: #{tpu_custom_call.1} parent=19 // pred_check
          %p239 = pneg %p108
        $region30: #{tpu_custom_call.1} parent=19 // pred_check_branch
          %241 = sbr.rel (%p239) target = $region32
        $region31: #{tpu_custom_call.1} parent=19 // pred_region
          %s242 = sand.u32 %s20, 1
          %s243 = scalar_lea.sflag [#allocation6], %s242
          %s244 = sand.u32 %s98, 1
          %s245 = smul.addr %s244, 16
          %s246 = scalar_lea.vmem [#allocation7], %s245
          %s247 = sadd.s32 %s20, 1
          %s248 = smul.u32 %s247, 8
          %p249 = scmp.lt.s32.totalorder %s248, 31
          %s250 = scalar_select %p249, %s248, 31
          %s251 = smul.u32 2, %s250
          %s253 = ssub.s32 256, 256
          %254 = vsyncadd %s243, %s253
          %s255 = smul.addr %s251, 128
          %s256 = scalar_lea.hbm %s2, %s255
          %s257 = sshll.u32 %s246, 4
          %s258 = int_to_ptr.vmem [resolvable:$true] %s257
          %263 = dma.hbm_to_vmem [thread:$0]  %s256, 256, %s258, %s243, 128, 128, 8
        $region32: #{tpu_custom_call.1} parent=19 // pred_fallthru
          _
      $region20: #{tpu_custom_call.1} parent=5 // pred_fallthru
        _
      %p264 = scmp.le.s32.totalorder 1, %s20
      %p265 = scmp.lt.s32.totalorder %s20, 5
      %p266 = pnand %p264, %p265
      %p267 = pneg %p266
      // Predicated region
      $region33: #{tpu_custom_call.1} parent=5 // pred_check
        _
      $region34: #{tpu_custom_call.1} parent=5 // pred_check_branch
        %269 = sbr.rel (%p266) target = $region36
      $region35: #{tpu_custom_call.1} parent=5 // pred_region
        %s270 = ssub.s32 %s20, 1
        %s271 = sand.u32 %s33, 1
        %s272 = scalar_lea.sflag [#allocation3], %s271
        %s273 = sand.u32 %s33, 1
        %s274 = smul.addr %s273, 128
        %s275 = scalar_lea.vmem [#allocation2], %s274
        // Predicated region
        $region37: #{tpu_custom_call.1} parent=35 // pred_check
          %p276 = pneg %p46
        $region38: #{tpu_custom_call.1} parent=35 // pred_check_branch
          %278 = sbr.rel (%p276) target = $region40
        $region39: #{tpu_custom_call.1} parent=35 // pred_region
          %279 = dma.done %s272, 2048
        $region40: #{tpu_custom_call.1} parent=35 // pred_fallthru
          _
        %s280 = sand.u32 %s25, 1
        %s281 = scalar_lea.sflag [#allocation6], %s280
        %s282 = sand.u32 %s67, 1
        %s283 = smul.addr %s282, 16
        %s284 = scalar_lea.vmem [#allocation5], %s283
        // Predicated region
        $region41: #{tpu_custom_call.1} parent=35 // pred_check
          %p285 = pneg %p80
        $region42: #{tpu_custom_call.1} parent=35 // pred_check_branch
          %287 = sbr.rel (%p285) target = $region44
        $region43: #{tpu_custom_call.1} parent=35 // pred_region
          %288 = dma.done %s281, 256
        $region44: #{tpu_custom_call.1} parent=35 // pred_fallthru
          _
        %s289 = sand.u32 %s25, 1
        %s290 = scalar_lea.sflag [#allocation6], %s289
        %s291 = sand.u32 %s101, 1
        %s292 = smul.addr %s291, 16
        %s293 = scalar_lea.vmem [#allocation7], %s292
        // Predicated region
        $region45: #{tpu_custom_call.1} parent=35 // pred_check
          %p294 = pneg %p114
        $region46: #{tpu_custom_call.1} parent=35 // pred_check_branch
          %296 = sbr.rel (%p294) target = $region48
        $region47: #{tpu_custom_call.1} parent=35 // pred_region
          %297 = dma.done %s290, 256
        $region48: #{tpu_custom_call.1} parent=35 // pred_fallthru
          _
        // Predicated region
        $region49: #{tpu_custom_call.1} parent=35 // pred_check
          %p298 = pneg %p135
        $region50: #{tpu_custom_call.1} parent=35 // pred_check_branch
          %300 = sbr.rel (%p298) target = $region52
        $region51: #{tpu_custom_call.1} parent=35 // pred_region
          %301 = dma.done [#allocation9], 2048
        $region52: #{tpu_custom_call.1} parent=35 // pred_fallthru
          _
        %s302 = sand.u32 %s33, 1
        %s303 = scalar_lea.sflag [#allocation3], %s302
        %s304 = sand.u32 %s33, 1
        %s305 = smul.addr %s304, 128
        %s306 = scalar_lea.vmem [#allocation2], %s305
        %p307 = pneg %p46
        %p308 = pneg %p43
        %s309 = sand.u32 %s25, 1
        %s310 = scalar_lea.sflag [#allocation6], %s309
        %s311 = sand.u32 %s67, 1
        %s312 = smul.addr %s311, 16
        %s313 = scalar_lea.vmem [#allocation5], %s312
        %p314 = pneg %p80
        %p315 = pneg %p77
        %s316 = sand.u32 %s25, 1
        %s317 = scalar_lea.sflag [#allocation6], %s316
        %s318 = sand.u32 %s101, 1
        %s319 = smul.addr %s318, 16
        %s320 = scalar_lea.vmem [#allocation7], %s319
        %p321 = pneg %p114
        %p322 = pneg %p111
        %p323 = pneg %p135
        %p324 = pneg %p132
        %p325 = pneg %p161
        %p326 = pneg %p158
        %s327 = sand.u32 %s148, 1
        %s328 = scalar_lea.sflag [#allocation4], %s327
        %s329 = sand.u32 %s148, 1
        %s330 = smul.addr %s329, 128
        %s331 = scalar_lea.vmem [#allocation10], %s330
        %s332 = smul.u32 16, %s25
        %s333 = smul.u32 %s25, 8
        %s334 = ssub.s32 %s333, 1
        %p335 = scmp.gt.s32.totalorder %s334, 0
        %s336 = scalar_select %p335, %s334, 0
        %s337 = smul.u32 2, %s336
        %s338 = sadd.s32 %s25, 1
        %s339 = smul.u32 %s338, 8
        %p340 = scmp.lt.s32.totalorder %s339, 31
        %s341 = scalar_select %p340, %s339, 31
        %s342 = smul.u32 2, %s341
        %s343 = smul.u32 16, %s25
        %v344 = vld [vmem:[%s275] sm:$0xff]
        %v345 = vld [vmem:[%s275 + $0x8] sm:$0xff]
        %v346 = vld [vmem:[%s275 + $0x10] sm:$0xff]
        %v347 = vld [vmem:[%s275 + $0x18] sm:$0xff]
        %v348 = vld [vmem:[%s275 + $0x20] sm:$0xff]
        %v349 = vld [vmem:[%s275 + $0x28] sm:$0xff]
        %v350 = vld [vmem:[%s275 + $0x30] sm:$0xff]
        %v351 = vld [vmem:[%s275 + $0x38] sm:$0xff]
        %v352 = vld [vmem:[%s275 + $0x40] sm:$0xff]
        %v353 = vld [vmem:[%s275 + $0x48] sm:$0xff]
        %v354 = vld [vmem:[%s275 + $0x50] sm:$0xff]
        %v355 = vld [vmem:[%s275 + $0x58] sm:$0xff]
        %v356 = vld [vmem:[%s275 + $0x60] sm:$0xff]
        %v357 = vld [vmem:[%s275 + $0x68] sm:$0xff]
        %v358 = vld [vmem:[%s275 + $0x70] sm:$0xff]
        %v359 = vld [vmem:[%s275 + $0x78] sm:$0xff]
        %v360 = vld [vmem:[%s284] sm:$0xff]
        %v361 = vld [vmem:[%s284 + $0x8] sm:$0xff]
        %v362 = vadd.f32 %v360, %v346
        %v363 = vadd.f32 %v361, %v347
        %v364 = vadd.f32 %v344, %v348
        %v365 = vadd.f32 %v345, %v349
        %v366 = vadd.f32 %v346, %v350
        %v367 = vadd.f32 %v347, %v351
        %v368 = vadd.f32 %v348, %v352
        %v369 = vadd.f32 %v349, %v353
        %v370 = vadd.f32 %v350, %v354
        %v371 = vadd.f32 %v351, %v355
        %v372 = vadd.f32 %v352, %v356
        %v373 = vadd.f32 %v353, %v357
        %v374 = vadd.f32 %v354, %v358
        %v375 = vadd.f32 %v355, %v359
        %v376 = vld [vmem:[%s293] sm:$0xff]
        %v377 = vld [vmem:[%s293 + $0x8] sm:$0xff]
        %v378 = vadd.f32 %v356, %v376
        %v379 = vadd.f32 %v357, %v377
        %v380 = vld [vmem:[#allocation8] sm:$0xff]
        %v381 = vld [vmem:[#allocation8 + $0x8] sm:$0xff]
        %v382 = vld [vmem:[#allocation8 + $0x10] sm:$0xff]
        %v383 = vld [vmem:[#allocation8 + $0x18] sm:$0xff]
        %v384 = vld [vmem:[#allocation8 + $0x20] sm:$0xff]
        %v385 = vld [vmem:[#allocation8 + $0x28] sm:$0xff]
        %v386 = vld [vmem:[#allocation8 + $0x30] sm:$0xff]
        %v387 = vld [vmem:[#allocation8 + $0x38] sm:$0xff]
        %v388 = vld [vmem:[#allocation8 + $0x40] sm:$0xff]
        %v389 = vld [vmem:[#allocation8 + $0x48] sm:$0xff]
        %v390 = vld [vmem:[#allocation8 + $0x50] sm:$0xff]
        %v391 = vld [vmem:[#allocation8 + $0x58] sm:$0xff]
        %v392 = vld [vmem:[#allocation8 + $0x60] sm:$0xff]
        %v393 = vld [vmem:[#allocation8 + $0x68] sm:$0xff]
        %v394 = vld [vmem:[#allocation8 + $0x70] sm:$0xff]
        %v395 = vld [vmem:[#allocation8 + $0x78] sm:$0xff]
        %396 = vmatprep.subr.mxu0 0.0
        %397 = vmatpush1.msra.mxu0 %v380
        %398 = vmatprep.subr.mxu0 0.0
        %399 = vmatpush1.msra.mxu0 %v381
        %400 = vmatprep.subr.mxu0 0.0
        %401 = vmatpush1.msra.mxu0 %v382
        %402 = vmatprep.subr.mxu0 0.0
        %403 = vmatpush1.msra.mxu0 %v383
        %404 = vmatprep.subr.mxu0 0.0
        %405 = vmatpush1.msra.mxu0 %v384
        %406 = vmatprep.subr.mxu0 0.0
        %407 = vmatpush1.msra.mxu0 %v385
        %408 = vmatprep.subr.mxu0 0.0
        %409 = vmatpush1.msra.mxu0 %v386
        %410 = vmatprep.subr.mxu0 0.0
        %411 = vmatpush1.msra.mxu0 %v387
        %412 = vmatprep.subr.mxu0 0.0
        %413 = vmatpush1.msra.mxu0 %v388
        %414 = vmatprep.subr.mxu0 0.0
        %415 = vmatpush1.msra.mxu0 %v389
        %416 = vmatprep.subr.mxu0 0.0
        %417 = vmatpush1.msra.mxu0 %v390
        %418 = vmatprep.subr.mxu0 0.0
        %419 = vmatpush1.msra.mxu0 %v391
        %420 = vmatprep.subr.mxu0 0.0
        %421 = vmatpush1.msra.mxu0 %v392
        %422 = vmatprep.subr.mxu0 0.0
        %423 = vmatpush1.msra.mxu0 %v393
        %424 = vmatprep.subr.mxu0 0.0
        %425 = vmatpush1.msra.mxu0 %v394
        %426 = vmatprep.subr.mxu0 0.0
        %427 = vmatpush1.msra.mxu0 %v395
        %428 = vmatprep.subr.mxu0 0.0
        %429 = vmatpush1.msra.mxu0 0.0
        %430 = vmatprep.subr.mxu0 0.0
        %431 = vmatpush1.msra.mxu0 0.0
        %432 = vmatprep.subr.mxu0 0.0
        %433 = vmatpush1.msra.mxu0 0.0
        %434 = vmatprep.subr.mxu0 0.0
        %435 = vmatpush1.msra.mxu0 0.0
        %436 = vmatprep.subr.mxu0 0.0
        %437 = vmatpush1.msra.mxu0 0.0
        %438 = vmatprep.subr.mxu0 0.0
        %439 = vmatpush1.msra.mxu0 0.0
        %440 = vmatprep.subr.mxu0 0.0
        %441 = vmatpush1.msra.mxu0 0.0
        %442 = vmatprep.subr.mxu0 0.0
        %443 = vmatpush1.msra.mxu0 0.0
        %444 = vmatprep.subr.mxu0 0.0
        %445 = vmatpush1.msra.mxu0 0.0
        %446 = vmatprep.subr.mxu0 0.0
        %447 = vmatpush1.msra.mxu0 0.0
        %448 = vmatprep.subr.mxu0 0.0
        %449 = vmatpush1.msra.mxu0 0.0
        %450 = vmatprep.subr.mxu0 0.0
        %451 = vmatpush1.msra.mxu0 0.0
        %452 = vmatprep.subr.mxu0 0.0
        %453 = vmatpush1.msra.mxu0 0.0
        %454 = vmatprep.subr.mxu0 0.0
        %455 = vmatpush1.msra.mxu0 0.0
        %456 = vmatprep.subr.mxu0 0.0
        %457 = vmatpush1.msra.mxu0 0.0
        %458 = vmatprep.subr.mxu0 0.0
        %459 = vmatpush1.msra.mxu0 0.0
        %460 = vmatprep.mubr.f32.mxu0 0.0
        %461 = vmatmul.mubr.f32.gmra.mrb[0].mxu0 %v362
        %v462 = vpop.f32.mrb[0].mxu0
        %v463 = vadd.f32 %v344, %v462
        %v464 = vpop.f32.mrb[0].mxu0
        %465 = vmatprep.mubr.f32.mxu0 0.0
        %466 = vmatmul.mubr.f32.gmra.mrb[0].mxu0 %v363
        %v467 = vpop.f32.mrb[0].mxu0
        %v468 = vadd.f32 %v345, %v467
        %v469 = vpop.f32.mrb[0].mxu0
        %470 = vmatprep.mubr.f32.mxu0 0.0
        %471 = vmatmul.mubr.f32.gmra.mrb[0].mxu0 %v364
        %v472 = vpop.f32.mrb[0].mxu0
        %v473 = vadd.f32 %v346, %v472
        %v474 = vpop.f32.mrb[0].mxu0
        %475 = vmatprep.mubr.f32.mxu0 0.0
        %476 = vmatmul.mubr.f32.gmra.mrb[0].mxu0 %v365
        %v477 = vpop.f32.mrb[0].mxu0
        %v478 = vadd.f32 %v347, %v477
        %v479 = vpop.f32.mrb[0].mxu0
        %480 = vmatprep.mubr.f32.mxu0 0.0
        %481 = vmatmul.mubr.f32.gmra.mrb[0].mxu0 %v366
        %v482 = vpop.f32.mrb[0].mxu0
        %v483 = vadd.f32 %v348, %v482
        %v484 = vpop.f32.mrb[0].mxu0
        %485 = vmatprep.mubr.f32.mxu0 0.0
        %486 = vmatmul.mubr.f32.gmra.mrb[0].mxu0 %v367
        %v487 = vpop.f32.mrb[0].mxu0
        %v488 = vadd.f32 %v349, %v487
        %v489 = vpop.f32.mrb[0].mxu0
        %490 = vmatprep.mubr.f32.mxu0 0.0
        %491 = vmatmul.mubr.f32.gmra.mrb[0].mxu0 %v368
        %v492 = vpop.f32.mrb[0].mxu0
        %v493 = vadd.f32 %v350, %v492
        %v494 = vpop.f32.mrb[0].mxu0
        %495 = vmatprep.mubr.f32.mxu0 0.0
        %496 = vmatmul.mubr.f32.gmra.mrb[0].mxu0 %v369
        %v497 = vpop.f32.mrb[0].mxu0
        %v498 = vadd.f32 %v351, %v497
        %v499 = vpop.f32.mrb[0].mxu0
        %500 = vmatprep.mubr.f32.mxu0 0.0
        %501 = vmatmul.mubr.f32.gmra.mrb[0].mxu0 %v370
        %v502 = vpop.f32.mrb[0].mxu0
        %v503 = vadd.f32 %v352, %v502
        %v504 = vpop.f32.mrb[0].mxu0
        %505 = vmatprep.mubr.f32.mxu0 0.0
        %506 = vmatmul.mubr.f32.gmra.mrb[0].mxu0 %v371
        %v507 = vpop.f32.mrb[0].mxu0
        %v508 = vadd.f32 %v353, %v507
        %v509 = vpop.f32.mrb[0].mxu0
        %510 = vmatprep.mubr.f32.mxu0 0.0
        %511 = vmatmul.mubr.f32.gmra.mrb[0].mxu0 %v372
        %v512 = vpop.f32.mrb[0].mxu0
        %v513 = vadd.f32 %v354, %v512
        %v514 = vpop.f32.mrb[0].mxu0
        %515 = vmatprep.mubr.f32.mxu0 0.0
        %516 = vmatmul.mubr.f32.gmra.mrb[0].mxu0 %v373
        %v517 = vpop.f32.mrb[0].mxu0
        %v518 = vadd.f32 %v355, %v517
        %v519 = vpop.f32.mrb[0].mxu0
        %520 = vmatprep.mubr.f32.mxu0 0.0
        %521 = vmatmul.mubr.f32.gmra.mrb[0].mxu0 %v374
        %v522 = vpop.f32.mrb[0].mxu0
        %v523 = vadd.f32 %v356, %v522
        %v524 = vpop.f32.mrb[0].mxu0
        %525 = vmatprep.mubr.f32.mxu0 0.0
        %526 = vmatmul.mubr.f32.gmra.mrb[0].mxu0 %v375
        %v527 = vpop.f32.mrb[0].mxu0
        %v528 = vadd.f32 %v357, %v527
        %v529 = vpop.f32.mrb[0].mxu0
        %530 = vmatprep.mubr.f32.mxu0 0.0
        %531 = vmatmul.mubr.f32.gmra.mrb[0].mxu0 %v378
        %v532 = vpop.f32.mrb[0].mxu0
        %v533 = vadd.f32 %v358, %v532
        %v534 = vpop.f32.mrb[0].mxu0
        %535 = vmatprep.mubr.f32.mxu0 0.0
        %536 = vmatmul.mubr.f32.gmra.mrb[0].mxu0 %v379
        %v537 = vpop.f32.mrb[0].mxu0
        %v538 = vadd.f32 %v359, %v537
        %v539 = vpop.f32.mrb[0].mxu0
        %540 = vdwg.mxu0
        %541 = vst [vmem:[%s331] sm:$0xff] %v463
        %542 = vst [vmem:[%s331 + $0x8] sm:$0xff] %v468
        %543 = vst [vmem:[%s331 + $0x10] sm:$0xff] %v473
        %544 = vst [vmem:[%s331 + $0x18] sm:$0xff] %v478
        %545 = vst [vmem:[%s331 + $0x20] sm:$0xff] %v483
        %546 = vst [vmem:[%s331 + $0x28] sm:$0xff] %v488
        %547 = vst [vmem:[%s331 + $0x30] sm:$0xff] %v493
        %548 = vst [vmem:[%s331 + $0x38] sm:$0xff] %v498
        %549 = vst [vmem:[%s331 + $0x40] sm:$0xff] %v503
        %550 = vst [vmem:[%s331 + $0x48] sm:$0xff] %v508
        %551 = vst [vmem:[%s331 + $0x50] sm:$0xff] %v513
        %552 = vst [vmem:[%s331 + $0x58] sm:$0xff] %v518
        %553 = vst [vmem:[%s331 + $0x60] sm:$0xff] %v523
        %554 = vst [vmem:[%s331 + $0x68] sm:$0xff] %v528
        %555 = vst [vmem:[%s331 + $0x70] sm:$0xff] %v533
        %556 = vst [vmem:[%s331 + $0x78] sm:$0xff] %v538
        %s557 = sand.u32 %s148, 1
        %s558 = scalar_lea.sflag [#allocation4], %s557
        %s559 = sand.u32 %s148, 1
        %s560 = smul.addr %s559, 128
        %s561 = scalar_lea.vmem [#allocation10], %s560
        // Predicated region
        $region53: #{tpu_custom_call.1} parent=35 // pred_check
          %p562 = pneg %p158
        $region54: #{tpu_custom_call.1} parent=35 // pred_check_branch
          %564 = sbr.rel (%p562) target = $region56
        $region55: #{tpu_custom_call.1} parent=35 // pred_region
          %s565 = smul.u32 16, %s25
          %s567 = ssub.s32 2048, 2048
          %568 = vsyncadd %s558, %s567
          %s569 = smul.addr %s565, 128
          %s570 = scalar_lea.hbm %s4, %s569
          %s571 = sshll.u32 %s561, 4
          %s572 = int_to_ptr.vmem [resolvable:$true] %s571
          %577 = dma.vmem_to_hbm [thread:$0]  %s572, 2048, %s570, %s558, 128, 128, 8
        $region56: #{tpu_custom_call.1} parent=35 // pred_fallthru
          _
      $region36: #{tpu_custom_call.1} parent=5 // pred_fallthru
        _
      %p578 = scmp.le.s32.totalorder 2, %s20
      // Predicated region
      $region57: #{tpu_custom_call.1} parent=5 // pred_check
        %p579 = pneg %p578
      $region58: #{tpu_custom_call.1} parent=5 // pred_check_branch
        %581 = sbr.rel (%p579) target = $region60
      $region59: #{tpu_custom_call.1} parent=5 // pred_region
        %s582 = ssub.s32 %s20, 2
        // Predicated region
        $region61: #{tpu_custom_call.1} parent=59 // pred_check
          %p583 = pneg %p164
        $region62: #{tpu_custom_call.1} parent=59 // pred_check_branch
          %585 = sbr.rel (%p583) target = $region64
        $region63: #{tpu_custom_call.1} parent=59 // pred_region
          %s586 = sand.u32 %s149, 1
          %s587 = scalar_lea.sflag [#allocation4], %s586
          %s588 = sand.u32 %s149, 1
          %s589 = smul.addr %s588, 128
          %s590 = scalar_lea.vmem [#allocation10], %s589
          %591 = dma.done %s587, 2048
        $region64: #{tpu_custom_call.1} parent=59 // pred_fallthru
          _
      $region60: #{tpu_custom_call.1} parent=5 // pred_fallthru
        _
    $region6: #{tpu_custom_call.1} parent=1 // loop_footer
      %s24 = sadd.s32 1, %s20
    $region7: #{tpu_custom_call.1} parent=1 // loop_footer_branch
      %19 = sbr.rel target = $region3
    $region8: #{tpu_custom_call.1} parent=1 // loop_exit
      _
    %592 = vsyncpa [#allocation3], 1
    %s593 = scalar_lea.sflag [#allocation3], 1
    %594 = vsyncpa %s593, 1
    %595 = vsyncpa [#allocation6], 1
    %s596 = scalar_lea.sflag [#allocation6], 1
    %597 = vsyncpa %s596, 1
    %598 = vsyncpa [#allocation9], 1
    %599 = vsyncpa [#allocation4], 1
    %s600 = scalar_lea.sflag [#allocation4], 1
    %601 = vsyncpa %s600, 1

</llo_original>
